<compile_context>
chip_gen: v7x
topology: tpu7x:2x2x1
jax: 0.10.0
libtpu: 0.0.40
codegen_flags: <defaults>
</compile_context>

<pallas_src>
import functools

import jax
import jax.numpy as jnp
from jax import lax
from jax.experimental import pallas as pl
from jax.experimental.pallas import tpu as pltpu

EPS = 1e-5
_VMEM_LIMIT = 32 * 1024 * 1024          # explicit scoped-VMEM budget (fits v5e/v6e/v7x)
_BLOCK_BUDGET = 2 * 1024 * 1024         # target bytes per (tn, C, tl) input block


def _stats_kernel(x_ref, g_ref, b_ref, scale_ref, bias_ref, sum_acc, sq_acc,
                  *, inv_count):
    """Accumulate per-channel sum / sum-of-squares; emit fused scale / bias."""
    i = pl.program_id(0)
    j = pl.program_id(1)

    @pl.when((i == 0) & (j == 0))
    def _init():
        sum_acc[...] = jnp.zeros_like(sum_acc)
        sq_acc[...] = jnp.zeros_like(sq_acc)

    x = x_ref[...].astype(jnp.float32)                     # (tn, C, tl)
    # Reduce only over the leading batch-tile axis per step (VPU adds overlap
    # with DMA); keep (C, tl) lane-wise partials, defer the cross-lane (XLU)
    # reduction to a single epilogue.
    sum_acc[...] += jnp.sum(x, axis=0)
    sq_acc[...] += jnp.sum(x * x, axis=0)

    @pl.when((i == pl.num_programs(0) - 1) & (j == pl.num_programs(1) - 1))
    def _finalize():
        s = jnp.sum(sum_acc[...], axis=1, keepdims=True)   # (C, 1)
        sq = jnp.sum(sq_acc[...], axis=1, keepdims=True)   # (C, 1)
        mean = s * inv_count
        var = sq * inv_count - mean * mean                 # biased variance
        var = jnp.maximum(var, 0.0)                        # guard cancellation
        scale = g_ref[...] * lax.rsqrt(var + EPS)          # (C, 1)
        scale_ref[...] = scale
        bias_ref[...] = b_ref[...] - mean * scale


def _normalize_kernel(x_ref, scale_ref, bias_ref, o_ref):
    """y = x * scale + bias — a single FMA per element in the bandwidth pass."""
    x = x_ref[...].astype(jnp.float32)                     # (tn, C, tl)
    s = scale_ref[...][None, :, :]                         # (1, C, 1)
    b = bias_ref[...][None, :, :]
    o_ref[...] = (x * s + b).astype(o_ref.dtype)


def _pick_l_tile(L):
    # Lane-dense tile: a multiple of 128 when possible, otherwise the full L
    # (full-extent last dim satisfies the (8,128) BlockSpec constraint).
    if L % 128 == 0:
        for cand in (512, 384, 256, 128):
            if L % cand == 0:
                return cand
    return L


def _pick_n_tile(N, C, tl, itemsize):
    best = 1
    for tn in range(1, N + 1):
        if N % tn == 0 and tn * C * tl * itemsize <= _BLOCK_BUDGET:
            best = tn
    return best


def no_cudnn_batchnorm1d(x, gamma, beta):
    """Training-mode BatchNorm1d. x: (N, C, L); gamma, beta: (C,)."""
    N, C, L = x.shape
    itemsize = jnp.dtype(x.dtype).itemsize
    tl = _pick_l_tile(L)
    tn = _pick_n_tile(N, C, tl, itemsize)
    gn, gl = N // tn, L // tl

    g = gamma.reshape(C, 1).astype(jnp.float32)
    b = beta.reshape(C, 1).astype(jnp.float32)

    x_spec = pl.BlockSpec((tn, C, tl), lambda i, j: (i, 0, j))
    cb_spec = pl.BlockSpec((C, 1), lambda i, j: (0, 0))

    # --- pass 1: per-channel statistics → fused scale / bias -----------------
    scale, bias = pl.pallas_call(
        functools.partial(_stats_kernel, inv_count=1.0 / float(N * L)),
        out_shape=(jax.ShapeDtypeStruct((C, 1), jnp.float32),
                   jax.ShapeDtypeStruct((C, 1), jnp.float32)),
        grid=(gn, gl),
        in_specs=[x_spec, cb_spec, cb_spec],
        out_specs=(cb_spec, cb_spec),
        scratch_shapes=[pltpu.VMEM((C, tl), jnp.float32),
                        pltpu.VMEM((C, tl), jnp.float32)],
        compiler_params=pltpu.CompilerParams(
            dimension_semantics=("arbitrary", "arbitrary"),
            vmem_limit_bytes=_VMEM_LIMIT),
    )(x, g, b)

    # --- pass 2: y = x * scale + bias -----------------------------------------
    return pl.pallas_call(
        _normalize_kernel,
        out_shape=jax.ShapeDtypeStruct((N, C, L), x.dtype),
        grid=(gn, gl),
        in_specs=[x_spec, cb_spec, cb_spec],
        out_specs=x_spec,
        compiler_params=pltpu.CompilerParams(
            dimension_semantics=("parallel", "parallel"),
            vmem_limit_bytes=_VMEM_LIMIT),
    )(x, scale, bias)


def _reference(x, gamma, beta):
    xf = x.astype(jnp.float32)
    mean = jnp.mean(xf, axis=(0, 2), keepdims=True)
    var = jnp.mean((xf - mean) ** 2, axis=(0, 2), keepdims=True)
    y = (xf - mean) / jnp.sqrt(var + EPS)
    return (y * gamma.reshape(1, -1, 1) + beta.reshape(1, -1, 1)).astype(x.dtype)


if __name__ == "__main__":
    key = jax.random.PRNGKey(0)
    kx, kg, kb, kx2 = jax.random.split(key, 4)

    # Small shape consistent with the module's (N, C, L) BatchNorm1d input.
    N, C, L = 2, 4, 16
    x = jax.random.normal(kx, (N, C, L), dtype=jnp.float32)
    gamma = 1.0 + 0.1 * jax.random.normal(kg, (C,), dtype=jnp.float32)
    beta = 0.1 * jax.random.normal(kb, (C,), dtype=jnp.float32)

    out = no_cudnn_batchnorm1d(x, gamma, beta)
    out = jax.block_until_ready(out)
    ref = _reference(x, gamma, beta)
    assert out.shape == (N, C, L) and out.dtype == x.dtype
    assert jnp.allclose(out, ref, atol=1e-4, rtol=1e-4), "mismatch vs reference"

    # Second check exercising lane-dense 128-multiple tiling and multi-tile
    # accumulation (gl > 1) — still tiny.
    N2, C2, L2 = 4, 8, 1024
    x2 = jax.random.normal(kx2, (N2, C2, L2), dtype=jnp.float32)
    g2 = jnp.linspace(0.5, 1.5, C2, dtype=jnp.float32)
    b2 = jnp.linspace(-0.2, 0.2, C2, dtype=jnp.float32)
    out2 = jax.block_until_ready(no_cudnn_batchnorm1d(x2, g2, b2))
    ref2 = _reference(x2, g2, b2)
    assert jnp.allclose(out2, ref2, atol=1e-4, rtol=1e-4), "mismatch (tiled case)"

    print("KERNEL_OK")
</pallas_src>

<mosaic_0001>
module attributes {stable_mosaic.version = 11 : i64} {
  func.func @_stats_kernel(%arg0: i32, %arg1: i32, %arg2: memref<2x4x16xf32, #tpu.memory_space<vmem>>, %arg3: memref<4x1xf32, #tpu.memory_space<vmem>>, %arg4: memref<4x1xf32, #tpu.memory_space<vmem>>, %arg5: memref<4x1xf32, #tpu.memory_space<vmem>>, %arg6: memref<4x1xf32, #tpu.memory_space<vmem>>, %arg7: memref<4x16xf32, #tpu.memory_space<vmem>>, %arg8: memref<4x16xf32, #tpu.memory_space<vmem>>) attributes {dimension_semantics = [#tpu.dimension_semantics<arbitrary>, #tpu.dimension_semantics<arbitrary>], iteration_bounds = array<i64: 1, 1>, scalar_prefetch = 0 : i64, scratch_operands = 2 : i64, tpu.core_type = #tpu.core_type<tc>, window_params = [{transform_indices = @transform_0, window_bounds = array<i64: 2, 4, 16>}, {pipeline_mode = #tpu.pipeline_mode<synchronous>, transform_indices = @transform_1, window_bounds = array<i64: 4, 1>}, {pipeline_mode = #tpu.pipeline_mode<synchronous>, transform_indices = @transform_2, window_bounds = array<i64: 4, 1>}, {pipeline_mode = #tpu.pipeline_mode<synchronous>, transform_indices = @transform_3, window_bounds = array<i64: 4, 1>}, {pipeline_mode = #tpu.pipeline_mode<synchronous>, transform_indices = @transform_4, window_bounds = array<i64: 4, 1>}]} {
    %c0_i32 = arith.constant 0 : i32
    %0 = arith.cmpi eq, %arg0, %c0_i32 : i32
    %c0_i32_0 = arith.constant 0 : i32
    %1 = arith.cmpi eq, %arg1, %c0_i32_0 : i32
    %2 = arith.andi %0, %1 : i1
    %3 = arith.extui %2 : i1 to i32
    %c0_i32_1 = arith.constant 0 : i32
    %4 = arith.cmpi ne, %3, %c0_i32_1 : i32
    scf.if %4 {
      %cst_16 = arith.constant 0.000000e+00 : f32
      %20 = vector.broadcast %cst_16 : f32 to vector<4x16xf32>
      %c0_17 = arith.constant 0 : index
      %c0_18 = arith.constant 0 : index
      %21 = vector.load %arg7[%c0_17, %c0_18] : memref<4x16xf32, #tpu.memory_space<vmem>>, vector<4x16xf32>
      tpu.vector_store %arg7[%c0_17, %c0_18], %20 {strides = array<i32>} : memref<4x16xf32, #tpu.memory_space<vmem>>, vector<4x16xf32>,
      %cst_19 = arith.constant 0.000000e+00 : f32
      %22 = vector.broadcast %cst_19 : f32 to vector<4x16xf32>
      %c0_20 = arith.constant 0 : index
      %c0_21 = arith.constant 0 : index
      %23 = vector.load %arg8[%c0_20, %c0_21] : memref<4x16xf32, #tpu.memory_space<vmem>>, vector<4x16xf32>
      tpu.vector_store %arg8[%c0_20, %c0_21], %22 {strides = array<i32>} : memref<4x16xf32, #tpu.memory_space<vmem>>, vector<4x16xf32>,
    } else {
    }
    %c0 = arith.constant 0 : index
    %c0_2 = arith.constant 0 : index
    %c0_3 = arith.constant 0 : index
    %5 = vector.load %arg2[%c0, %c0_2, %c0_3] : memref<2x4x16xf32, #tpu.memory_space<vmem>>, vector<2x4x16xf32>
    %c0_4 = arith.constant 0 : index
    %c0_5 = arith.constant 0 : index
    %6 = vector.load %arg7[%c0_4, %c0_5] : memref<4x16xf32, #tpu.memory_space<vmem>>, vector<4x16xf32>
    %cst = arith.constant dense<0.000000e+00> : vector<4x16xf32>
    %7 = vector.multi_reduction <add>, %5, %cst [0] : vector<2x4x16xf32> to vector<4x16xf32>
    %8 = arith.addf %6, %7 : vector<4x16xf32>
    %c0_6 = arith.constant 0 : index
    %c0_7 = arith.constant 0 : index
    %9 = vector.load %arg7[%c0_6, %c0_7] : memref<4x16xf32, #tpu.memory_space<vmem>>, vector<4x16xf32>
    tpu.vector_store %arg7[%c0_6, %c0_7], %8 {strides = array<i32>} : memref<4x16xf32, #tpu.memory_space<vmem>>, vector<4x16xf32>,
    %c0_8 = arith.constant 0 : index
    %c0_9 = arith.constant 0 : index
    %10 = vector.load %arg8[%c0_8, %c0_9] : memref<4x16xf32, #tpu.memory_space<vmem>>, vector<4x16xf32>
    %11 = arith.mulf %5, %5 : vector<2x4x16xf32>
    %cst_10 = arith.constant dense<0.000000e+00> : vector<4x16xf32>
    %12 = vector.multi_reduction <add>, %11, %cst_10 [0] : vector<2x4x16xf32> to vector<4x16xf32>
    %13 = arith.addf %10, %12 : vector<4x16xf32>
    %c0_11 = arith.constant 0 : index
    %c0_12 = arith.constant 0 : index
    %14 = vector.load %arg8[%c0_11, %c0_12] : memref<4x16xf32, #tpu.memory_space<vmem>>, vector<4x16xf32>
    tpu.vector_store %arg8[%c0_11, %c0_12], %13 {strides = array<i32>} : memref<4x16xf32, #tpu.memory_space<vmem>>, vector<4x16xf32>,
    %c0_i32_13 = arith.constant 0 : i32
    %15 = arith.cmpi eq, %arg0, %c0_i32_13 : i32
    %c0_i32_14 = arith.constant 0 : i32
    %16 = arith.cmpi eq, %arg1, %c0_i32_14 : i32
    %17 = arith.andi %15, %16 : i1
    %18 = arith.extui %17 : i1 to i32
    %c0_i32_15 = arith.constant 0 : i32
    %19 = arith.cmpi ne, %18, %c0_i32_15 : i32
    scf.if %19 {
      %c0_16 = arith.constant 0 : index
      %c0_17 = arith.constant 0 : index
      %20 = vector.load %arg7[%c0_16, %c0_17] : memref<4x16xf32, #tpu.memory_space<vmem>>, vector<4x16xf32>
      %cst_18 = arith.constant dense<0.000000e+00> : vector<4xf32>
      %21 = vector.multi_reduction <add>, %20, %cst_18 [1] : vector<4x16xf32> to vector<4xf32>
      %22 = vector.shape_cast %21 : vector<4xf32> to vector<4x1xf32>
      %c0_19 = arith.constant 0 : index
      %c0_20 = arith.constant 0 : index
      %23 = vector.load %arg8[%c0_19, %c0_20] : memref<4x16xf32, #tpu.memory_space<vmem>>, vector<4x16xf32>
      %cst_21 = arith.constant dense<0.000000e+00> : vector<4xf32>
      %24 = vector.multi_reduction <add>, %23, %cst_21 [1] : vector<4x16xf32> to vector<4xf32>
      %25 = vector.shape_cast %24 : vector<4xf32> to vector<4x1xf32>
      %cst_22 = arith.constant 3.125000e-02 : f32
      %26 = vector.broadcast %cst_22 : f32 to vector<4x1xf32>
      %27 = arith.mulf %22, %26 : vector<4x1xf32>
      %cst_23 = arith.constant 3.125000e-02 : f32
      %28 = vector.broadcast %cst_23 : f32 to vector<4x1xf32>
      %29 = arith.mulf %25, %28 : vector<4x1xf32>
      %30 = arith.mulf %27, %27 : vector<4x1xf32>
      %31 = arith.subf %29, %30 : vector<4x1xf32>
      %cst_24 = arith.constant 0.000000e+00 : f32
      %32 = vector.broadcast %cst_24 : f32 to vector<4x1xf32>
      %33 = arith.maximumf %31, %32 : vector<4x1xf32>
      %c0_25 = arith.constant 0 : index
      %c0_26 = arith.constant 0 : index
      %34 = vector.load %arg3[%c0_25, %c0_26] : memref<4x1xf32, #tpu.memory_space<vmem>>, vector<4x1xf32>
      %cst_27 = arith.constant 9.99999974E-6 : f32
      %35 = vector.broadcast %cst_27 : f32 to vector<4x1xf32>
      %36 = arith.addf %33, %35 : vector<4x1xf32>
      %37 = math.rsqrt %36 : vector<4x1xf32>
      %38 = arith.mulf %34, %37 : vector<4x1xf32>
      %c0_28 = arith.constant 0 : index
      %c0_29 = arith.constant 0 : index
      %39 = vector.load %arg5[%c0_28, %c0_29] : memref<4x1xf32, #tpu.memory_space<vmem>>, vector<4x1xf32>
      tpu.vector_store %arg5[%c0_28, %c0_29], %38 {strides = array<i32>} : memref<4x1xf32, #tpu.memory_space<vmem>>, vector<4x1xf32>,
      %c0_30 = arith.constant 0 : index
      %c0_31 = arith.constant 0 : index
      %40 = vector.load %arg4[%c0_30, %c0_31] : memref<4x1xf32, #tpu.memory_space<vmem>>, vector<4x1xf32>
      %41 = arith.mulf %27, %38 : vector<4x1xf32>
      %42 = arith.subf %40, %41 : vector<4x1xf32>
      %c0_32 = arith.constant 0 : index
      %c0_33 = arith.constant 0 : index
      %43 = vector.load %arg6[%c0_32, %c0_33] : memref<4x1xf32, #tpu.memory_space<vmem>>, vector<4x1xf32>
      tpu.vector_store %arg6[%c0_32, %c0_33], %42 {strides = array<i32>} : memref<4x1xf32, #tpu.memory_space<vmem>>, vector<4x1xf32>,
    } else {
    }
    return
  }
  func.func @transform_0(%arg0: i32, %arg1: i32) -> (i32, i32, i32) {
    %c0_i32 = arith.constant 0 : i32
    %c0_i32_0 = arith.constant 0 : i32
    return %arg0, %c0_i32, %arg1 : i32, i32, i32
  }
  func.func @transform_1(%arg0: i32, %arg1: i32) -> (i32, i32) {
    %c0_i32 = arith.constant 0 : i32
    %c0_i32_0 = arith.constant 0 : i32
    %c0_i32_1 = arith.constant 0 : i32
    return %c0_i32, %c0_i32_0 : i32, i32
  }
  func.func @transform_2(%arg0: i32, %arg1: i32) -> (i32, i32) {
    %c0_i32 = arith.constant 0 : i32
    %c0_i32_0 = arith.constant 0 : i32
    %c0_i32_1 = arith.constant 0 : i32
    return %c0_i32, %c0_i32_0 : i32, i32
  }
  func.func @transform_3(%arg0: i32, %arg1: i32) -> (i32, i32) {
    %c0_i32 = arith.constant 0 : i32
    %c0_i32_0 = arith.constant 0 : i32
    %c0_i32_1 = arith.constant 0 : i32
    return %c0_i32, %c0_i32_0 : i32, i32
  }
  func.func @transform_4(%arg0: i32, %arg1: i32) -> (i32, i32) {
    %c0_i32 = arith.constant 0 : i32
    %c0_i32_0 = arith.constant 0 : i32
    %c0_i32_1 = arith.constant 0 : i32
    return %c0_i32, %c0_i32_0 : i32, i32
  }
}

</mosaic_0001>

<llo_original>
// kernel: tpu_custom_call.1
$region0: #{tpu_custom_call.1}
  #allocation0 [shape = 'u32[]', space=smem, size = 0x4, offset = 0x4, fixed_abs, tag = 'smem constant byte address 0x4 - core index']
  #allocation1 [shape = 'u32[144,128]{1,0:T(1,128)}', space=vmem, size = 0x12000, scoped, tag = 'internal scratch']
  #allocation2 [shape = 'f32[4,16]{1,0:T(4,128)}', space=vmem, size = 0x800, scoped, tag = 'scratch operand']
  #allocation3 [shape = 'f32[4,16]{1,0:T(4,128)}', space=vmem, size = 0x800, scoped, tag = 'scratch operand']
  %s0 = inlined_call_operand.vmem [shape: f32[2,4,16], index: 0, kind: input, shape index: {}]
  %s1 = inlined_call_operand.vmem [shape: f32[4,1], index: 1, kind: input, shape index: {}]
  %s2 = inlined_call_operand.vmem [shape: f32[4,1], index: 2, kind: input, shape index: {}]
  %s3 = inlined_call_operand.vmem [shape: f32[4,1], index: 3, kind: output, shape index: {0}]
  %s4 = inlined_call_operand.vmem [shape: f32[4,1], index: 4, kind: output, shape index: {1}]
  %5 = xla_tuple %s3, %s4
  %s6 = sld [smem:[#allocation0]]
  $region38: #{tpu_custom_call.1} parent=0
    _
  %s8 = ssub.s32 1, %s6
  %s9 = scalar_select 0, %s8, %s6
  // Predicated region
  $region2: #{tpu_custom_call.1} parent=0 // pred_check
    _
  $region3: #{tpu_custom_call.1} parent=0 // pred_check_branch
    %11 = sbr.rel (0) target = $region5
  $region4: #{tpu_custom_call.1} parent=0 // pred_region
    _
  $region5: #{tpu_custom_call.1} parent=0 // pred_fallthru
    _
  // Predicated region
  $region6: #{tpu_custom_call.1} parent=0 // pred_check
    _
  $region7: #{tpu_custom_call.1} parent=0 // pred_check_branch
    %13 = sbr.rel (0) target = $region9
  $region8: #{tpu_custom_call.1} parent=0 // pred_region
    _
  $region9: #{tpu_custom_call.1} parent=0 // pred_fallthru
    _
  // Predicated region
  $region10: #{tpu_custom_call.1} parent=0 // pred_check
    _
  $region11: #{tpu_custom_call.1} parent=0 // pred_check_branch
    %15 = sbr.rel (0) target = $region13
  $region12: #{tpu_custom_call.1} parent=0 // pred_region
    _
  $region13: #{tpu_custom_call.1} parent=0 // pred_fallthru
    _
  %p16 = scmp.eq.s32.totalorder 0, 0
  %p17 = scmp.eq.s32.totalorder 0, 0
  %p18 = pnand %p16, %p17
  %p19 = pneg %p18
  // Predicated region
  $region14: #{tpu_custom_call.1} parent=0 // pred_check
    _
  $region15: #{tpu_custom_call.1} parent=0 // pred_check_branch
    %21 = sbr.rel (%p18) target = $region17
  $region16: #{tpu_custom_call.1} parent=0 // pred_region
    %vm22 = vcmask 125952
    %23 = vst.msk [vmem:[#allocation2] sm:$0xf] %vm22, 0.0
    %24 = vst.msk [vmem:[#allocation3] sm:$0xf] %vm22, 0.0
  $region17: #{tpu_custom_call.1} parent=0 // pred_fallthru
    _
  %v25 = vld [vmem:[%s0] sm:$0xf]
  %v26 = vld [vmem:[%s0 + $0x4] sm:$0xf]
  %v27 = vld [vmem:[#allocation2] sm:$0xf]
  %vm28 = vcmask 125952
  %v29 = vsel %vm28, %v25, 0.0
  %v30 = vsel %vm28, %v26, 0.0
  %v31 = vadd.f32 %v29, %v30
  %v32 = vadd.f32 %v27, %v31
  %33 = vst.msk [vmem:[#allocation2] sm:$0xf] %vm28, %v32
  %v34 = vld [vmem:[#allocation3] sm:$0xf]
  %v35 = vmul.f32 %v25, %v25
  %v36 = vmul.f32 %v26, %v26
  %v37 = vsel %vm28, %v35, 0.0
  %v38 = vsel %vm28, %v36, 0.0
  %v39 = vadd.f32 %v37, %v38
  %v40 = vadd.f32 %v34, %v39
  %41 = vst.msk [vmem:[#allocation3] sm:$0xf] %vm28, %v40
  // Predicated region
  $region18: #{tpu_custom_call.1} parent=0 // pred_check
    _
  $region19: #{tpu_custom_call.1} parent=0 // pred_check_branch
    %43 = sbr.rel (%p18) target = $region21
  $region20: #{tpu_custom_call.1} parent=0 // pred_region
    %v44 = vld [vmem:[#allocation2] sm:$0xf]
    %v45 = vsel %vm28, %v44, 0.0
    %46 = vadd.xlane.f32.xlu0 %v45
    %v47 = vpop.xlane.xlu0 %46
    %v48 = vld [vmem:[#allocation3] sm:$0xf]
    %v49 = vsel %vm28, %v48, 0.0
    %50 = vadd.xlane.f32.xlu0 %v49
    %v51 = vpop.xlane.xlu0 %50
    %v52 = vmul.f32 %v47, 0.03125
    %v53 = vmul.f32 %v51, 0.03125
    %v54 = vmul.f32 %v52, %v52
    %v55 = vsub.f32 %v53, %v54
    %v56 = vmax.f32 %v55, 0.0
    %v57 = vld [vmem:[%s1] sm:$0xf]
    %v58 = vadd.f32 %v56, 1e-05
    %v59 = vrsqrt.pop %v58
    %v60 = vmul.f32 %v57, %v59
    %vm61 = vcmask 3072
    %62 = vst.msk [vmem:[%s3] sm:$0xf] %vm61, %v60
    %v63 = vld [vmem:[%s2] sm:$0xf]
    %v64 = vmul.f32 %v52, %v60
    %v65 = vsub.f32 %v63, %v64
    %66 = vst.msk [vmem:[%s4] sm:$0xf] %vm61, %v65
  $region21: #{tpu_custom_call.1} parent=0 // pred_fallthru
    _
  // Predicated region
  $region22: #{tpu_custom_call.1} parent=0 // pred_check
    _
  $region23: #{tpu_custom_call.1} parent=0 // pred_check_branch
    %68 = sbr.rel (0) target = $region25
  $region24: #{tpu_custom_call.1} parent=0 // pred_region
    _
  $region25: #{tpu_custom_call.1} parent=0 // pred_fallthru
    _
  // Predicated region
  $region26: #{tpu_custom_call.1} parent=0 // pred_check
    _
  $region27: #{tpu_custom_call.1} parent=0 // pred_check_branch
    %70 = sbr.rel (0) target = $region29
  $region28: #{tpu_custom_call.1} parent=0 // pred_region
    _
  $region29: #{tpu_custom_call.1} parent=0 // pred_fallthru
    _
  // Predicated region
  $region30: #{tpu_custom_call.1} parent=0 // pred_check
    _
  $region31: #{tpu_custom_call.1} parent=0 // pred_check_branch
    %72 = sbr.rel (0) target = $region33
  $region32: #{tpu_custom_call.1} parent=0 // pred_region
    _
  $region33: #{tpu_custom_call.1} parent=0 // pred_fallthru
    _
  // Predicated region
  $region34: #{tpu_custom_call.1} parent=0 // pred_check
    _
  $region35: #{tpu_custom_call.1} parent=0 // pred_check_branch
    %74 = sbr.rel (0) target = $region37
  $region36: #{tpu_custom_call.1} parent=0 // pred_region
    _
  $region37: #{tpu_custom_call.1} parent=0 // pred_fallthru
    _

</llo_original>
